<compile_context>
chip_gen: v5e
topology: v5e:2x2
jax: 0.10.0
libtpu: 0.0.40
codegen_flags: <defaults>
</compile_context>

<pallas_src>
import functools
import math

import jax
import jax.numpy as jnp
from jax.experimental import pallas as pl
from jax.experimental.pallas import tpu as pltpu


def _layer_norm_rowwise_kernel(x_ref, gamma_ref, beta_ref, o_ref, *, eps):
    """LayerNorm over the last dim of a (row_block, C) tile (general path)."""
    x = x_ref[...].astype(jnp.float32)
    mean = jnp.mean(x, axis=-1, keepdims=True)
    xc = x - mean
    var = jnp.mean(xc * xc, axis=-1, keepdims=True)        # biased variance
    inv = jax.lax.rsqrt(var + eps)                         # EUP rsqrt
    y = xc * inv * gamma_ref[...] + beta_ref[...]
    o_ref[...] = y.astype(o_ref.dtype)


def _layer_norm_packed_kernel(x_ref, gamma_ref, beta_ref, p_ref, o_ref, *, eps):
    """Lane-dense LayerNorm: k = 128 // C channel groups packed per lane row.

    p_ref holds the (128, 128) block-diagonal averaging matrix P with
    P[i, j] = 1/C iff i // C == j // C, so `x @ P` gives every lane the mean of
    its own group (cross-lane reduce + broadcast done in one MXU pass).
    Stats stay per-group, so semantics match per-row LayerNorm over C.
    """
    x = x_ref[...].astype(jnp.float32)                     # (rb, 128)
    p = p_ref[...]                                         # (128, 128) f32
    mean = jnp.dot(x, p, preferred_element_type=jnp.float32)
    xc = x - mean
    var = jnp.dot(xc * xc, p, preferred_element_type=jnp.float32)
    inv = jax.lax.rsqrt(var + eps)
    y = xc * inv * gamma_ref[...] + beta_ref[...]
    o_ref[...] = y.astype(o_ref.dtype)


def layer_norm_pallas(feature, gamma, beta, *, eps=1e-6, row_block=None):
    """feature: (..., C); gamma, beta: (C,). Returns same shape/dtype as feature."""
    orig_shape = feature.shape
    C = int(orig_shape[-1])
    rows = int(math.prod(orig_shape[:-1]))
    dtype = feature.dtype
    itemsize = jnp.dtype(dtype).itemsize
    pack = max(8, 32 // itemsize)            # sublane packing: 8 f32 / 16 bf16 / 32 int8

    # Lane-dense packing when C < 128 and it tiles cleanly.
    k = 128 // C if (C < 128 and 128 % C == 0) else 1
    packed = (k > 1) and (rows % k == 0)
    if packed:
        rows2, c_eff = rows // k, 128
    else:
        rows2, c_eff = rows, C

    x2d = feature.reshape(rows2, c_eff)
    g32 = gamma.astype(jnp.float32).reshape(-1)
    b32 = beta.astype(jnp.float32).reshape(-1)

    # ---- row-block from a VMEM budget ----
    # 2x double-buffered (input + output) blocks + ~4 f32 full-tile temporaries.
    per_row = 4 * c_eff * itemsize + 16 * c_eff
    budget = 24 * 1024 * 1024
    rb = max(pack, min(2048, (budget // per_row) // pack * pack))
    if row_block is not None:
        rb = max(pack, (min(rb, int(row_block)) // pack) * pack)
    if rb >= rows2:
        # One full-extent block is always a legal block shape.
        rb = rows2
        if rows2 > 256:
            # Keep >= 2 grid steps so v7x's two TensorCores both get work.
            rb = max(pack, ((pl.cdiv(rows2, 2) + pack - 1) // pack) * pack)
    grid = (pl.cdiv(rows2, rb),)

    if packed:
        kern = functools.partial(_layer_norm_packed_kernel, eps=eps)
        g2d = jnp.tile(g32, k).reshape(1, 128)
        b2d = jnp.tile(b32, k).reshape(1, 128)
        grp = jnp.arange(128, dtype=jnp.int32) // C
        p_mat = (grp[:, None] == grp[None, :]).astype(jnp.float32) / float(C)
        in_specs = [
            pl.BlockSpec((rb, 128), lambda i: (i, 0)),      # x row tile
            pl.BlockSpec((1, 128), lambda i: (0, 0)),       # gamma (VMEM-resident)
            pl.BlockSpec((1, 128), lambda i: (0, 0)),       # beta
            pl.BlockSpec((128, 128), lambda i: (0, 0)),     # averaging matrix P
        ]
        operands = (x2d, g2d, b2d, p_mat)
        flops = rows2 * (4 * 128 * 128 + 6 * 128)
    else:
        kern = functools.partial(_layer_norm_rowwise_kernel, eps=eps)
        in_specs = [
            pl.BlockSpec((rb, c_eff), lambda i: (i, 0)),
            pl.BlockSpec((1, c_eff), lambda i: (0, 0)),
            pl.BlockSpec((1, c_eff), lambda i: (0, 0)),
        ]
        operands = (x2d, g32.reshape(1, c_eff), b32.reshape(1, c_eff))
        flops = 9 * rows2 * c_eff

    cost = pl.CostEstimate(
        flops=int(flops),
        transcendentals=int(rows),                          # one rsqrt per logical row
        bytes_accessed=int(2 * rows2 * c_eff * itemsize + 8 * c_eff),
    )

    out2d = pl.pallas_call(
        kern,
        out_shape=jax.ShapeDtypeStruct((rows2, c_eff), dtype),
        grid_spec=pltpu.PrefetchScalarGridSpec(
            num_scalar_prefetch=0,
            grid=grid,
            in_specs=in_specs,
            out_specs=pl.BlockSpec((rb, c_eff), lambda i: (i, 0)),
        ),
        compiler_params=pltpu.CompilerParams(
            dimension_semantics=("parallel",),
            vmem_limit_bytes=48 * 1024 * 1024,
        ),
        cost_estimate=cost,
    )(*operands)

    return out2d.reshape(orig_shape)


def _reference_layer_norm(x, gamma, beta, eps=1e-6):
    x32 = x.astype(jnp.float32)
    mean = jnp.mean(x32, axis=-1, keepdims=True)
    var = jnp.mean((x32 - mean) ** 2, axis=-1, keepdims=True)   # unbiased=False
    y = (x32 - mean) / jnp.sqrt(var + eps)
    return (y * gamma.astype(jnp.float32) + beta.astype(jnp.float32)).astype(x.dtype)


if __name__ == "__main__":
    key = jax.random.PRNGKey(0)
    kx, kg, kb, kx2, kx3 = jax.random.split(key, 5)

    C = 32
    gamma = 1.0 + 0.1 * jax.random.normal(kg, (C,), dtype=jnp.float32)
    beta = 0.1 * jax.random.normal(kb, (C,), dtype=jnp.float32)

    # Case 1: module-shaped input (B, N, C) = (2, 8, 32) -> lane-packed path, grid of 1.
    x1 = jax.random.normal(kx, (2, 8, C), dtype=jnp.float32)
    o1 = layer_norm_pallas(x1, gamma, beta, eps=1e-6)
    jax.block_until_ready(o1)
    r1 = _reference_layer_norm(x1, gamma, beta, eps=1e-6)
    assert o1.shape == x1.shape
    assert jnp.allclose(o1, r1, atol=1e-5, rtol=1e-5), "mismatch vs. reference (case 1)"

    # Case 2: rows not divisible by the packing factor -> general row-wise path.
    x2 = jax.random.normal(kx2, (3, 10, C), dtype=jnp.float32)
    o2 = layer_norm_pallas(x2, gamma, beta, eps=1e-6)
    jax.block_until_ready(o2)
    r2 = _reference_layer_norm(x2, gamma, beta, eps=1e-6)
    assert o2.shape == x2.shape
    assert jnp.allclose(o2, r2, atol=1e-5, rtol=1e-5), "mismatch vs. reference (case 2)"

    # Case 3: multi-step grid with a masked partial edge block (no pad/slice in wrapper).
    x3 = jax.random.normal(kx3, (4, 20, C), dtype=jnp.float32)
    o3 = layer_norm_pallas(x3, gamma, beta, eps=1e-6, row_block=8)
    jax.block_until_ready(o3)
    r3 = _reference_layer_norm(x3, gamma, beta, eps=1e-6)
    assert o3.shape == x3.shape
    assert jnp.allclose(o3, r3, atol=1e-5, rtol=1e-5), "mismatch vs. reference (case 3)"

    # Case 4: bf16 input (f32 statistics inside the kernel).
    x4 = x1.astype(jnp.bfloat16)
    o4 = layer_norm_pallas(x4, gamma, beta, eps=1e-6)
    jax.block_until_ready(o4)
    r4 = _reference_layer_norm(x4, gamma, beta, eps=1e-6)
    assert o4.shape == x4.shape
    assert jnp.allclose(o4.astype(jnp.float32), r4.astype(jnp.float32),
                        atol=5e-2, rtol=5e-2), "mismatch vs. reference (case 4)"

    print("KERNEL_OK")
</pallas_src>

<mosaic_0001>
module attributes {stable_mosaic.version = 11 : i64} {
  func.func @_layer_norm_packed_kernel(%arg0: i32, %arg1: memref<4x128xf32, #tpu.memory_space<vmem>>, %arg2: memref<1x128xf32, #tpu.memory_space<vmem>>, %arg3: memref<1x128xf32, #tpu.memory_space<vmem>>, %arg4: memref<128x128xf32, #tpu.memory_space<vmem>>, %arg5: memref<4x128xf32, #tpu.memory_space<vmem>>) attributes {dimension_semantics = [#tpu.dimension_semantics<parallel>], iteration_bounds = array<i64: 1>, scalar_prefetch = 0 : i64, scratch_operands = 0 : i64, tpu.core_type = #tpu.core_type<tc>, window_params = [{transform_indices = @transform_0, window_bounds = array<i64: 4, 128>}, {pipeline_mode = #tpu.pipeline_mode<synchronous>, transform_indices = @transform_1, window_bounds = array<i64: 1, 128>}, {pipeline_mode = #tpu.pipeline_mode<synchronous>, transform_indices = @transform_2, window_bounds = array<i64: 1, 128>}, {pipeline_mode = #tpu.pipeline_mode<synchronous>, transform_indices = @transform_3, window_bounds = array<i64: 128, 128>}, {transform_indices = @transform_4, window_bounds = array<i64: 4, 128>}]} {
    %c0 = arith.constant 0 : index
    %c0_0 = arith.constant 0 : index
    %0 = vector.load %arg1[%c0, %c0_0] : memref<4x128xf32, #tpu.memory_space<vmem>>, vector<4x128xf32>
    %c0_1 = arith.constant 0 : index
    %c0_2 = arith.constant 0 : index
    %1 = vector.load %arg4[%c0_1, %c0_2] : memref<128x128xf32, #tpu.memory_space<vmem>>, vector<128x128xf32>
    %cst = arith.constant dense<0.000000e+00> : vector<4x128xf32>
    %2 = tpu.matmul %0, %1, %cst {dimension_numbers = #tpu.dot_dimension_numbers<[1], [0], [0], [1], [0, 0, 1, 1], [], []>} : vector<4x128xf32>, vector<128x128xf32>, vector<4x128xf32> -> vector<4x128xf32>
    %3 = arith.subf %0, %2 : vector<4x128xf32>
    %4 = arith.mulf %3, %3 : vector<4x128xf32>
    %cst_3 = arith.constant dense<0.000000e+00> : vector<4x128xf32>
    %5 = tpu.matmul %4, %1, %cst_3 {dimension_numbers = #tpu.dot_dimension_numbers<[1], [0], [0], [1], [0, 0, 1, 1], [], []>} : vector<4x128xf32>, vector<128x128xf32>, vector<4x128xf32> -> vector<4x128xf32>
    %cst_4 = arith.constant 9.99999997E-7 : f32
    %6 = vector.broadcast %cst_4 : f32 to vector<4x128xf32>
    %7 = arith.addf %5, %6 : vector<4x128xf32>
    %8 = math.rsqrt %7 : vector<4x128xf32>
    %9 = arith.mulf %3, %8 : vector<4x128xf32>
    %c0_5 = arith.constant 0 : index
    %c0_6 = arith.constant 0 : index
    %10 = vector.load %arg2[%c0_5, %c0_6] : memref<1x128xf32, #tpu.memory_space<vmem>>, vector<1x128xf32>
    %11 = vector.broadcast %10 : vector<1x128xf32> to vector<4x128xf32>
    %12 = arith.mulf %9, %11 : vector<4x128xf32>
    %c0_7 = arith.constant 0 : index
    %c0_8 = arith.constant 0 : index
    %13 = vector.load %arg3[%c0_7, %c0_8] : memref<1x128xf32, #tpu.memory_space<vmem>>, vector<1x128xf32>
    %14 = vector.broadcast %13 : vector<1x128xf32> to vector<4x128xf32>
    %15 = arith.addf %12, %14 : vector<4x128xf32>
    %c0_9 = arith.constant 0 : index
    %c0_10 = arith.constant 0 : index
    %16 = vector.load %arg5[%c0_9, %c0_10] : memref<4x128xf32, #tpu.memory_space<vmem>>, vector<4x128xf32>
    tpu.vector_store %arg5[%c0_9, %c0_10], %15 {strides = array<i32>} : memref<4x128xf32, #tpu.memory_space<vmem>>, vector<4x128xf32>,
    return
  }
  func.func @transform_0(%arg0: i32) -> (i32, i32) {
    %c0_i32 = arith.constant 0 : i32
    %c0_i32_0 = arith.constant 0 : i32
    return %arg0, %c0_i32 : i32, i32
  }
  func.func @transform_1(%arg0: i32) -> (i32, i32) {
    %c0_i32 = arith.constant 0 : i32
    %c0_i32_0 = arith.constant 0 : i32
    %c0_i32_1 = arith.constant 0 : i32
    return %c0_i32, %c0_i32_0 : i32, i32
  }
  func.func @transform_2(%arg0: i32) -> (i32, i32) {
    %c0_i32 = arith.constant 0 : i32
    %c0_i32_0 = arith.constant 0 : i32
    %c0_i32_1 = arith.constant 0 : i32
    return %c0_i32, %c0_i32_0 : i32, i32
  }
  func.func @transform_3(%arg0: i32) -> (i32, i32) {
    %c0_i32 = arith.constant 0 : i32
    %c0_i32_0 = arith.constant 0 : i32
    %c0_i32_1 = arith.constant 0 : i32
    return %c0_i32, %c0_i32_0 : i32, i32
  }
  func.func @transform_4(%arg0: i32) -> (i32, i32) {
    %c0_i32 = arith.constant 0 : i32
    %c0_i32_0 = arith.constant 0 : i32
    return %arg0, %c0_i32 : i32, i32
  }
}

</mosaic_0001>

<llo_original>
// kernel: tpu_custom_call.1
$region0: #{tpu_custom_call.1}
  #allocation0 [shape = 'u32[]', space=smem, size = 0x4, offset = 0x4, fixed_abs, tag = 'smem constant byte address 0x4 - core index']
  #allocation1 [shape = 'u32[72,128]{1,0:T(1,128)}', space=vmem, size = 0x9000, scoped, tag = 'internal scratch']
  %s0 = inlined_call_operand.hbm [shape: f32[4,128], index: 0, kind: input, shape index: {}]
  %s1 = inlined_call_operand.hbm [shape: f32[1,128], index: 1, kind: input, shape index: {}]
  %s2 = inlined_call_operand.vmem [shape: f32[1,128], index: 2, kind: input, shape index: {}]
  %s3 = inlined_call_operand.hbm [shape: f32[128,128], index: 3, kind: input, shape index: {}]
  %s4 = inlined_call_operand.hbm [shape: f32[4,128], index: 4, kind: output, shape index: {}]
  %s5 = sld [smem:[#allocation0]]
  $region38: #{tpu_custom_call.1} parent=0
    _
  %s7 = ssub.s32 1, %s5
  %s8 = scalar_select 0, %s7, %s5
  $region1: #{tpu_custom_call.1} parent=0
    #allocation2 [shape = 'u8[2048]{0}', space=vmem, size = 0x800, scoped, tag = 'input window, operand 0, single buffered']
    #allocation3 [shape = 's32[1]{0}', space=sflag, size = 0x4, scoped, tag = 'scoped memory for tpu_custom_call.1']
    #allocation4 [shape = 's32[1]{0}', space=sflag, size = 0x4, scoped, tag = 'scoped memory for tpu_custom_call.1']
    #allocation5 [shape = 'u8[512]{0}', space=vmem, size = 0x400, scoped, tag = 'input window, operand 1, single buffered']
    #allocation6 [shape = 's32[1]{0}', space=sflag, size = 0x4, scoped, tag = 'scoped memory for tpu_custom_call.1']
    #allocation7 [shape = 'u8[65536]{0}', space=vmem, size = 0x10000, scoped, tag = 'input window, operand 3, single buffered']
    #allocation8 [shape = 'u8[2048]{0}', space=vmem, size = 0x800, scoped, tag = 'output window, operand 0, single buffered']
    %9 = vsyncpa [#allocation3], 0
    %10 = vsyncpa [#allocation6], 0
    %11 = vsyncpa [#allocation4], 0
    // Predicated region
    $region2: #{tpu_custom_call.1} parent=1 // pred_check
      _
    $region3: #{tpu_custom_call.1} parent=1 // pred_check_branch
      %13 = sbr.rel (0) target = $region5
    $region4: #{tpu_custom_call.1} parent=1 // pred_region
      %15 = vsyncadd [#allocation3], 0
      %s17 = sshll.u32 %s0, 4
      %s18 = int_to_ptr.hbm [resolvable:$true] %s17
      %s19 = sshll.u32 [#allocation2], 4
      %s20 = int_to_ptr.vmem [resolvable:$true] %s19
      %22 = dma.hbm_to_vmem [thread:$0]  %s18, 64, %s20, [#allocation3]
    $region5: #{tpu_custom_call.1} parent=1 // pred_fallthru
      _
    // Predicated region
    $region6: #{tpu_custom_call.1} parent=1 // pred_check
      _
    $region7: #{tpu_custom_call.1} parent=1 // pred_check_branch
      %24 = sbr.rel (0) target = $region9
    $region8: #{tpu_custom_call.1} parent=1 // pred_region
      %26 = vsyncadd [#allocation6], 0
      %s28 = sshll.u32 %s1, 4
      %s29 = int_to_ptr.hbm [resolvable:$true] %s28
      %s30 = sshll.u32 [#allocation5], 4
      %s31 = int_to_ptr.vmem [resolvable:$true] %s30
      %33 = dma.hbm_to_vmem [thread:$0]  %s29, 16, %s31, [#allocation6]
    $region9: #{tpu_custom_call.1} parent=1 // pred_fallthru
      _
    // Predicated region
    $region10: #{tpu_custom_call.1} parent=1 // pred_check
      _
    $region11: #{tpu_custom_call.1} parent=1 // pred_check_branch
      %35 = sbr.rel (0) target = $region13
    $region12: #{tpu_custom_call.1} parent=1 // pred_region
      _
    $region13: #{tpu_custom_call.1} parent=1 // pred_fallthru
      _
    // Predicated region
    $region14: #{tpu_custom_call.1} parent=1 // pred_check
      _
    $region15: #{tpu_custom_call.1} parent=1 // pred_check_branch
      %37 = sbr.rel (0) target = $region17
    $region16: #{tpu_custom_call.1} parent=1 // pred_region
      %39 = vsyncadd [#allocation6], 0
      %s40 = sshll.u32 %s3, 4
      %s41 = int_to_ptr.hbm [resolvable:$true] %s40
      %s42 = sshll.u32 [#allocation7], 4
      %s43 = int_to_ptr.vmem [resolvable:$true] %s42
      %48 = dma.hbm_to_vmem [thread:$0]  %s41, 2048, %s43, [#allocation6], 128, 128, 8
    $region17: #{tpu_custom_call.1} parent=1 // pred_fallthru
      _
    // Predicated region
    $region18: #{tpu_custom_call.1} parent=1 // pred_check
      _
    $region19: #{tpu_custom_call.1} parent=1 // pred_check_branch
      %50 = sbr.rel (0) target = $region21
    $region20: #{tpu_custom_call.1} parent=1 // pred_region
      %52 = dma.done [#allocation3], 64
    $region21: #{tpu_custom_call.1} parent=1 // pred_fallthru
      _
    // Predicated region
    $region22: #{tpu_custom_call.1} parent=1 // pred_check
      _
    $region23: #{tpu_custom_call.1} parent=1 // pred_check_branch
      %54 = sbr.rel (0) target = $region25
    $region24: #{tpu_custom_call.1} parent=1 // pred_region
      %56 = dma.done [#allocation6], 16
    $region25: #{tpu_custom_call.1} parent=1 // pred_fallthru
      _
    // Predicated region
    $region26: #{tpu_custom_call.1} parent=1 // pred_check
      _
    $region27: #{tpu_custom_call.1} parent=1 // pred_check_branch
      %58 = sbr.rel (0) target = $region29
    $region28: #{tpu_custom_call.1} parent=1 // pred_region
      %60 = dma.done [#allocation6], 2048
    $region29: #{tpu_custom_call.1} parent=1 // pred_fallthru
      _
    %v61 = vld [vmem:[#allocation2] sm:$0xf]
    %v62 = vld [vmem:[#allocation7] sm:$0xff]
    %v63 = vld [vmem:[#allocation7 + $0x8] sm:$0xff]
    %v64 = vld [vmem:[#allocation7 + $0x10] sm:$0xff]
    %v65 = vld [vmem:[#allocation7 + $0x18] sm:$0xff]
    %v66 = vld [vmem:[#allocation7 + $0x20] sm:$0xff]
    %v67 = vld [vmem:[#allocation7 + $0x28] sm:$0xff]
    %v68 = vld [vmem:[#allocation7 + $0x30] sm:$0xff]
    %v69 = vld [vmem:[#allocation7 + $0x38] sm:$0xff]
    %v70 = vld [vmem:[#allocation7 + $0x40] sm:$0xff]
    %v71 = vld [vmem:[#allocation7 + $0x48] sm:$0xff]
    %v72 = vld [vmem:[#allocation7 + $0x50] sm:$0xff]
    %v73 = vld [vmem:[#allocation7 + $0x58] sm:$0xff]
    %v74 = vld [vmem:[#allocation7 + $0x60] sm:$0xff]
    %v75 = vld [vmem:[#allocation7 + $0x68] sm:$0xff]
    %v76 = vld [vmem:[#allocation7 + $0x70] sm:$0xff]
    %v77 = vld [vmem:[#allocation7 + $0x78] sm:$0xff]
    %78 = vmatpush.msra.mxu0 %v77
    %79 = vmatpush.msra.mxu0 %v76
    %80 = vmatpush.msra.mxu0 %v75
    %81 = vmatpush.msra.mxu0 %v74
    %82 = vmatpush.msra.mxu0 %v73
    %83 = vmatpush.msra.mxu0 %v72
    %84 = vmatpush.msra.mxu0 %v71
    %85 = vmatpush.msra.mxu0 %v70
    %86 = vmatpush.msra.mxu0 %v69
    %87 = vmatpush.msra.mxu0 %v68
    %88 = vmatpush.msra.mxu0 %v67
    %89 = vmatpush.msra.mxu0 %v66
    %90 = vmatpush.msra.mxu0 %v65
    %91 = vmatpush.msra.mxu0 %v64
    %92 = vmatpush.msra.mxu0 %v63
    %93 = vmatpush.msra.mxu0 %v62
    %94 = vmatmul.f32.gmra.mxu0 %v61
    %v95 = vpop.f32.mrf.mxu0
    %v96 = vadd.f32 0.0, %v95
    %97 = vdwg.mxu0
    %v98 = vsub.f32 %v61, %v96
    %v99 = vmul.f32 %v98, %v98
    %100 = vmatpush.msra.mxu0 %v77
    %101 = vmatpush.msra.mxu0 %v76
    %102 = vmatpush.msra.mxu0 %v75
    %103 = vmatpush.msra.mxu0 %v74
    %104 = vmatpush.msra.mxu0 %v73
    %105 = vmatpush.msra.mxu0 %v72
    %106 = vmatpush.msra.mxu0 %v71
    %107 = vmatpush.msra.mxu0 %v70
    %108 = vmatpush.msra.mxu0 %v69
    %109 = vmatpush.msra.mxu0 %v68
    %110 = vmatpush.msra.mxu0 %v67
    %111 = vmatpush.msra.mxu0 %v66
    %112 = vmatpush.msra.mxu0 %v65
    %113 = vmatpush.msra.mxu0 %v64
    %114 = vmatpush.msra.mxu0 %v63
    %115 = vmatpush.msra.mxu0 %v62
    %116 = vmatmul.f32.gmra.mxu0 %v99
    %v117 = vpop.f32.mrf.mxu0
    %v118 = vadd.f32 1e-06, %v117
    %119 = vdwg.mxu0
    %v120 = vrsqrt.pop %v118
    %v121 = vmul.f32 %v120, %v118
    %v122 = vmul.f32 %v121, %v120
    %v123 = vmul.f32 0.5, %v122
    %v124 = vsub.f32 1.5, %v123
    %v125 = vmul.f32 %v120, %v124
    %vm126 = vweird.f32 %v118
    %vm127 = vweird.f32 %v120
    %vm128 = vmor %vm126, %vm127
    %v129 = vsel %vm128, %v120, %v125
    %v130 = vmul.f32 %v98, %v129
    %v131 = vld [vmem:[#allocation5] sm:$0x1]
    %v133 = vperm.slane %v131, 0
    %v135 = vmul.f32 %v130, %v133
    %v136 = vld [vmem:[%s2] sm:$0x1]
    %v138 = vperm.slane %v136, 0
    %v140 = vadd.f32 %v135, %v138
    %141 = vst [vmem:[#allocation8] sm:$0xf] %v140
    // Predicated region
    $region30: #{tpu_custom_call.1} parent=1 // pred_check
      _
    $region31: #{tpu_custom_call.1} parent=1 // pred_check_branch
      %143 = sbr.rel (0) target = $region33
    $region32: #{tpu_custom_call.1} parent=1 // pred_region
      %145 = vsyncadd [#allocation4], 0
      %s147 = sshll.u32 [#allocation8], 4
      %s148 = int_to_ptr.vmem [resolvable:$true] %s147
      %s149 = sshll.u32 %s4, 4
      %s150 = int_to_ptr.hbm [resolvable:$true] %s149
      %152 = dma.vmem_to_hbm [thread:$0]  %s148, 64, %s150, [#allocation4]
    $region33: #{tpu_custom_call.1} parent=1 // pred_fallthru
      _
    // Predicated region
    $region34: #{tpu_custom_call.1} parent=1 // pred_check
      _
    $region35: #{tpu_custom_call.1} parent=1 // pred_check_branch
      %154 = sbr.rel (0) target = $region37
    $region36: #{tpu_custom_call.1} parent=1 // pred_region
      %156 = dma.done [#allocation4], 64
    $region37: #{tpu_custom_call.1} parent=1 // pred_fallthru
      _
    %157 = vsyncpa [#allocation3], 1
    %158 = vsyncpa [#allocation6], 1
    %159 = vsyncpa [#allocation4], 1

</llo_original>
